<compile_context>
chip_gen: v7x
topology: tpu7x:2x2x1
jax: 0.10.0
libtpu: 0.0.40
codegen_flags: <defaults>
</compile_context>

<pallas_src>
import numpy as np
import jax
import jax.numpy as jnp
from jax.experimental import pallas as pl
from jax.experimental.pallas import tpu as pltpu


# ----------------------------------------------------------------------------
# Kernel
# ----------------------------------------------------------------------------
def _broadcast_kernel(table_ref, o_ref):
    # table_ref: (1, TF) f32 — sinusoid-table tile (stays resident in VMEM;
    #            the pipeline only re-DMAs it when the flat-block index moves).
    # o_ref:     (TB, TF) f32 — lane-dense output tile.
    o_ref[...] = jnp.broadcast_to(table_ref[...], o_ref.shape)


# ----------------------------------------------------------------------------
# Host-side table (exact float64 math of the reference, then f32 cast)
# ----------------------------------------------------------------------------
def _host_table(emb_dim: int, max_len: int) -> np.ndarray:
    n_position = max_len + 1
    position_enc = np.array(
        [
            [pos / np.power(10000, 2 * (j // 2) / emb_dim) for j in range(emb_dim)]
            if pos != 0
            else np.zeros(emb_dim)
            for pos in range(n_position)
        ]
    )
    position_enc[1:, 0::2] = np.sin(position_enc[1:, 0::2])
    position_enc[1:, 1::2] = np.cos(position_enc[1:, 1::2])
    return position_enc[1:].astype(np.float32)  # (max_len, emb_dim)


# ----------------------------------------------------------------------------
# Tiling
# ----------------------------------------------------------------------------
def _cdiv(a: int, b: int) -> int:
    return -(-a // b)


def _round_up(x: int, m: int) -> int:
    return ((x + m - 1) // m) * m


def _choose_tiling(batch: int, flat: int, target_block_bytes: int = 8 << 20):
    """Pick (tb, tf): batch tile and flat tile for the (batch, flat) output."""
    elt = 4  # f32

    # Flat-axis tile: keep tf == flat unless even an 8-row block would exceed
    # the target; then use a 128-lane-aligned chunk so TB never drops below 8.
    if 8 * flat * elt > target_block_bytes and flat > 128:
        tf = max(128, (target_block_bytes // (8 * elt)) // 128 * 128)
        tf = min(tf, flat)
    else:
        tf = flat

    # Batch tile: a multiple of 8 (sublane-dense) or the whole batch.
    tb_cap = max(1, target_block_bytes // (tf * elt))
    if tb_cap >= batch:
        tb = batch
    else:
        tb = min(batch, max(8, (tb_cap // 8) * 8))

    # Megacore: if everything landed in a single grid step and the output is
    # big enough to care, split the batch so "parallel" semantics can shard
    # the work across both v7x TensorCores.
    nf = _cdiv(flat, tf)
    if (
        tb == batch
        and nf == 1
        and batch >= 16
        and batch * flat * elt >= (512 << 10)
    ):
        tb = min(batch, _round_up(_cdiv(batch, 2), 8))

    return tb, tf


# ----------------------------------------------------------------------------
# Wrapper
# ----------------------------------------------------------------------------
def positional_encoder_2(
    emb_dim: int, max_len: int, batch_size: int, *, target_block_bytes: int = 8 << 20
):
    """Returns (batch_size, max_len, emb_dim) float32 positional encodings."""
    flat = max_len * emb_dim
    table = jnp.asarray(_host_table(emb_dim, max_len).reshape(1, flat))

    tb, tf = _choose_tiling(batch_size, flat, target_block_bytes)
    nb, nf = _cdiv(batch_size, tb), _cdiv(flat, tf)

    block_bytes = tb * tf * 4
    table_tile_bytes = tf * 4
    # Double-buffered output tile + (resident, double-buffered) table tile +
    # slack.  Explicit so v5e's 16 MiB default scoped limit never bites while
    # staying well under v7x's 64 MiB physical VMEM.
    vmem_limit = min(
        max(2 * block_bytes + 2 * table_tile_bytes + (2 << 20), 32 << 20), 48 << 20
    )

    out_flat = pl.pallas_call(
        _broadcast_kernel,
        out_shape=jax.ShapeDtypeStruct((batch_size, flat), jnp.float32),
        grid_spec=pltpu.PrefetchScalarGridSpec(
            num_scalar_prefetch=0,
            grid=(nb, nf),
            in_specs=[pl.BlockSpec((1, tf), lambda b, f: (0, f))],
            out_specs=pl.BlockSpec((tb, tf), lambda b, f: (b, f)),
        ),
        compiler_params=pltpu.CompilerParams(
            dimension_semantics=("parallel", "parallel"),
            vmem_limit_bytes=vmem_limit,
        ),
        cost_estimate=pl.CostEstimate(
            flops=0,
            transcendentals=0,
            bytes_accessed=batch_size * flat * 4 + nf * tf * 4,
        ),
    )(table)

    # Layout plumbing only: (B, L*E) -> (B, L, E) is a contiguous reshape.
    return out_flat.reshape(batch_size, max_len, emb_dim)


# ----------------------------------------------------------------------------
# Reference + self-test
# ----------------------------------------------------------------------------
def _numpy_reference(emb_dim: int, max_len: int, batch_size: int) -> np.ndarray:
    table = _host_table(emb_dim, max_len)  # (max_len, emb_dim) f32
    return np.broadcast_to(table[None], (batch_size, max_len, emb_dim)).copy()


if __name__ == "__main__":
    # Small shapes consistent with the module: emb_dim=32, max_len=8, batch=2.
    emb_dim, max_len, batch_size = 32, 8, 2

    # No tensor inputs for this module; PRNGKey kept for determinism convention.
    _ = jax.random.PRNGKey(0)

    out = positional_encoder_2(emb_dim, max_len, batch_size)
    out = jax.block_until_ready(out)

    ref = _numpy_reference(emb_dim, max_len, batch_size)
    assert out.shape == (batch_size, max_len, emb_dim)
    assert out.dtype == jnp.float32
    np.testing.assert_allclose(np.asarray(out), ref, rtol=1e-7, atol=1e-7)

    print("KERNEL_OK")
</pallas_src>

<mosaic_0001>
module attributes {stable_mosaic.version = 11 : i64} {
  func.func @_broadcast_kernel(%arg0: i32, %arg1: i32, %arg2: memref<1x256xf32, #tpu.memory_space<vmem>>, %arg3: memref<2x256xf32, #tpu.memory_space<vmem>>) attributes {dimension_semantics = [#tpu.dimension_semantics<parallel>, #tpu.dimension_semantics<parallel>], iteration_bounds = array<i64: 1, 1>, scalar_prefetch = 0 : i64, scratch_operands = 0 : i64, tpu.core_type = #tpu.core_type<tc>, window_params = [{transform_indices = @transform_0, window_bounds = array<i64: 1, 256>}, {transform_indices = @transform_1, window_bounds = array<i64: 2, 256>}]} {
    %c0 = arith.constant 0 : index
    %c0_0 = arith.constant 0 : index
    %0 = vector.load %arg2[%c0, %c0_0] : memref<1x256xf32, #tpu.memory_space<vmem>>, vector<1x256xf32>
    %1 = vector.shape_cast %0 : vector<1x256xf32> to vector<1x256xf32>
    %2 = vector.broadcast %1 : vector<1x256xf32> to vector<2x256xf32>
    %c0_1 = arith.constant 0 : index
    %c0_2 = arith.constant 0 : index
    %3 = vector.load %arg3[%c0_1, %c0_2] : memref<2x256xf32, #tpu.memory_space<vmem>>, vector<2x256xf32>
    tpu.vector_store %arg3[%c0_1, %c0_2], %2 {strides = array<i32>} : memref<2x256xf32, #tpu.memory_space<vmem>>, vector<2x256xf32>,
    return
  }
  func.func @transform_0(%arg0: i32, %arg1: i32) -> (i32, i32) {
    %c0_i32 = arith.constant 0 : i32
    %c0_i32_0 = arith.constant 0 : i32
    return %c0_i32, %arg1 : i32, i32
  }
  func.func @transform_1(%arg0: i32, %arg1: i32) -> (i32, i32) {
    %c0_i32 = arith.constant 0 : i32
    return %arg0, %arg1 : i32, i32
  }
}

</mosaic_0001>

<llo_original>
// kernel: tpu_custom_call.1
$region0: #{tpu_custom_call.1}
  #allocation0 [shape = 'u32[]', space=smem, size = 0x4, offset = 0x4, fixed_abs, tag = 'smem constant byte address 0x4 - core index']
  #allocation1 [shape = 'u32[144,128]{1,0:T(1,128)}', space=vmem, size = 0x12000, scoped, tag = 'internal scratch']
  %s0 = inlined_call_operand.hbm [shape: f32[1,256], index: 0, kind: input, shape index: {}]
  %s1 = inlined_call_operand.hbm [shape: f32[2,256], index: 1, kind: output, shape index: {}]
  %s2 = sld [smem:[#allocation0]]
  $region18: #{tpu_custom_call.1} parent=0
    _
  %s4 = ssub.s32 1, %s2
  %s5 = scalar_select 0, %s4, %s2
  $region1: #{tpu_custom_call.1} parent=0
    #allocation2 [shape = 'u8[1024]{0}', space=vmem, size = 0x400, scoped, tag = 'input window, operand 0, single buffered']
    #allocation3 [shape = 's32[1]{0}', space=sflag, size = 0x4, scoped, tag = 'scoped memory for tpu_custom_call.1']
    #allocation4 [shape = 's32[1]{0}', space=sflag, size = 0x4, scoped, tag = 'scoped memory for tpu_custom_call.1']
    #allocation5 [shape = 'u8[2048]{0}', space=vmem, size = 0x800, scoped, tag = 'output window, operand 0, single buffered']
    %6 = vsyncpa [#allocation3], 0
    %7 = vsyncpa [#allocation4], 0
    // Predicated region
    $region2: #{tpu_custom_call.1} parent=1 // pred_check
      _
    $region3: #{tpu_custom_call.1} parent=1 // pred_check_branch
      %9 = sbr.rel (0) target = $region5
    $region4: #{tpu_custom_call.1} parent=1 // pred_region
      %s11 = ssub.s32 32, 32
      %12 = vsyncadd [#allocation3], %s11
      %s14 = sshll.u32 [#allocation2], 4
      %s15 = int_to_ptr.vmem [resolvable:$true] %s14
      %17 = dma.hbm_to_vmem [thread:$0]  %s0, 32, %s15, [#allocation3]
    $region5: #{tpu_custom_call.1} parent=1 // pred_fallthru
      _
    // Predicated region
    $region6: #{tpu_custom_call.1} parent=1 // pred_check
      _
    $region7: #{tpu_custom_call.1} parent=1 // pred_check_branch
      %19 = sbr.rel (0) target = $region9
    $region8: #{tpu_custom_call.1} parent=1 // pred_region
      %20 = dma.done [#allocation3], 32
    $region9: #{tpu_custom_call.1} parent=1 // pred_fallthru
      _
    %v21 = vld [vmem:[#allocation2] sm:$0x3]
    %v23 = vlaneseq
    %v24 = vshrl.u32 %v23, 7
    %v25 = vsub.s32 0, %v24
    %v26 = vrot.slane %v21, %v25
    %v27 = vlaneseq
    %v28 = vshrl.u32 %v27, 7
    %v29 = vsub.s32 1, %v28
    %v30 = vrot.slane %v21, %v29
    %v31 = vcombine.low %v26, %v30
    %v33 = vunpack.c.l.s4 1983009808
    %v34 = vunpack.c.0.s8 %v33
    %v35 = vlaneseq
    %v36 = vshrl.u32 %v35, 7
    %v37 = vsub.s32 %v34, %v36
    %v38 = vrot.slane %v31, %v37
    %40 = vst [vmem:[#allocation5] sm:$0xf] %v38
    // Predicated region
    $region10: #{tpu_custom_call.1} parent=1 // pred_check
      _
    $region11: #{tpu_custom_call.1} parent=1 // pred_check_branch
      %42 = sbr.rel (0) target = $region13
    $region12: #{tpu_custom_call.1} parent=1 // pred_region
      %s44 = ssub.s32 64, 64
      %45 = vsyncadd [#allocation4], %s44
      %s47 = sshll.u32 [#allocation5], 4
      %s48 = int_to_ptr.vmem [resolvable:$true] %s47
      %50 = dma.vmem_to_hbm [thread:$0]  %s48, 64, %s1, [#allocation4]
    $region13: #{tpu_custom_call.1} parent=1 // pred_fallthru
      _
    // Predicated region
    $region14: #{tpu_custom_call.1} parent=1 // pred_check
      _
    $region15: #{tpu_custom_call.1} parent=1 // pred_check_branch
      %52 = sbr.rel (0) target = $region17
    $region16: #{tpu_custom_call.1} parent=1 // pred_region
      %53 = dma.done [#allocation4], 64
    $region17: #{tpu_custom_call.1} parent=1 // pred_fallthru
      _
    %54 = vsyncpa [#allocation3], 1
    %55 = vsyncpa [#allocation4], 1

</llo_original>
